<compile_context>
chip_gen: v7x
topology: tpu7x:2x2x1
jax: 0.10.0
libtpu: 0.0.40
codegen_flags: <defaults>
</compile_context>

<pallas_src>
import functools

import jax
import jax.numpy as jnp
from jax.experimental import pallas as pl
from jax.experimental.pallas import tpu as pltpu

EPS = 1e-6
INV_SQRT2 = 0.7071067811865476

# bf16 operands keep the MXU on its native fast path (v5e/v6e/v7x); set to
# jnp.float32 if bit-exact f32 matmul parity with torch is required.
MXU_DTYPE = jnp.bfloat16

# Target rows (matmul M) per grid step: 256-512 fills the 256-wide MXU on
# v6e/v7x while keeping the f32 intermediates small.
ROW_TARGET = 512

# Explicit scoped-VMEM cap: above the 16/32 MiB defaults, still safe on the
# 64 MiB v7x part.
VMEM_LIMIT_BYTES = 48 * 1024 * 1024


def _pick_row_tile(nrows, width, target=ROW_TARGET):
    """Largest divisor t of `nrows` such that t*width <= target (at least 1)."""
    best = 1
    for t in range(1, nrows + 1):
        if nrows % t == 0 and t * width <= max(target, width):
            best = t
    return best


# --------------------------------------------------------------------------
# Kernel 1: fused channels_first LayerNorm + 2x2 stride-2 conv (downsample).
#
# Input xr has shape (N, H, W/2, 2C): lanes hold [pixel(h,2w) | pixel(h,2w+1)],
# a free reshape of the NHWC tensor.  Each grid step produces THo output rows.
# --------------------------------------------------------------------------
def downsample_kernel(xr_ref, lnw_ref, lnb_ref, w_ref, b_ref, o_ref,
                      *, THo, Wo, C):
    xb = xr_ref[0].astype(jnp.float32)          # (2*THo, Wo, 2C)
    lnw = lnw_ref[...]                          # (1, C) f32
    lnb = lnb_ref[...]

    def ln(t):                                  # per-pixel LN over C
        m = jnp.mean(t, axis=-1, keepdims=True)
        v = jnp.mean((t - m) ** 2, axis=-1, keepdims=True)
        return (t - m) * jax.lax.rsqrt(v + EPS) * lnw + lnb

    # Normalize both pixels that share a lane row, then rebuild the 2C vector.
    xn = jnp.concatenate([ln(xb[..., :C]), ln(xb[..., C:])], axis=-1)
    xn = xn.reshape(THo, 2, Wo, 2 * C)
    # 4C patch row ordering = (kh, kw, cin): [row 2ho | row 2ho+1], each row
    # already laid out as [pix 2wo | pix 2wo+1].  Matches conv_w.reshape(4C, 2C).
    patches = jnp.concatenate([xn[:, 0], xn[:, 1]], axis=-1)   # (THo, Wo, 4C)
    patches = patches.reshape(THo * Wo, 4 * C)

    y = jnp.dot(patches.astype(w_ref.dtype), w_ref[...],
                preferred_element_type=jnp.float32) + b_ref[...]
    o_ref[0] = y.reshape(THo, Wo, 2 * C).astype(o_ref.dtype)


def downsample(x_nhwc, p):
    N, H, W, C = x_nhwc.shape
    Ho, Wo, C2 = H // 2, W // 2, 2 * C
    # Free (bitcast) reshape: pairs W-adjacent pixels onto the lane axis.
    xr = x_nhwc.reshape(N, H, Wo, C2)
    THo = _pick_row_tile(Ho, Wo)
    kern = functools.partial(downsample_kernel, THo=THo, Wo=Wo, C=C)
    return pl.pallas_call(
        kern,
        out_shape=jax.ShapeDtypeStruct((N, Ho, Wo, C2), x_nhwc.dtype),
        grid=(N, Ho // THo),
        in_specs=[
            pl.BlockSpec((1, 2 * THo, Wo, C2), lambda n, h: (n, h, 0, 0)),
            pl.BlockSpec((1, C), lambda n, h: (0, 0)),
            pl.BlockSpec((1, C), lambda n, h: (0, 0)),
            pl.BlockSpec((4 * C, C2), lambda n, h: (0, 0)),
            pl.BlockSpec((1, C2), lambda n, h: (0, 0)),
        ],
        out_specs=pl.BlockSpec((1, THo, Wo, C2), lambda n, h: (n, h, 0, 0)),
        compiler_params=pltpu.CompilerParams(
            dimension_semantics=("parallel", "parallel"),
            vmem_limit_bytes=VMEM_LIMIT_BYTES),
    )(xr, p["ln_w"].reshape(1, C), p["ln_b"].reshape(1, C),
      p["conv_w"].astype(MXU_DTYPE), p["conv_b"].reshape(1, C2))


# --------------------------------------------------------------------------
# Kernel 2: one fused ConvNeXt block.
#   grid = (N, H // TH); the padded image lives in a VMEM scratch built once
#   per batch element (h axis is "arbitrary" => sequential, h==0 runs first).
# --------------------------------------------------------------------------
def block_kernel(x_ref, dww_ref, dwb_ref, lnw_ref, lnb_ref, w1_ref, b1_ref,
                 w2_ref, b2_ref, g_ref, o_ref, pad_ref, *, TH, H, W, C):
    h = pl.program_id(1)

    # Build the 3-pixel zero halo in VMEM scratch (no HBM jnp.pad round trip).
    @pl.when(h == 0)
    def _():
        pad_ref[...] = jnp.zeros_like(pad_ref)
        pad_ref[3:3 + H, 3:3 + W, :] = x_ref[0].astype(jnp.float32)

    xwin = pad_ref[pl.ds(h * TH, TH + 6), :, :]        # (TH+6, W+6, C) f32
    wdw = dww_ref[...].astype(jnp.float32)             # (49, C)

    # 7x7 depthwise conv over TH output rows; small (TH, W, C) accumulator.
    acc = jnp.zeros((TH, W, C), jnp.float32)
    for kh in range(7):
        xrow = xwin[kh:kh + TH]                        # (TH, W+6, C)
        for kw in range(7):
            tap = wdw[kh * 7 + kw:kh * 7 + kw + 1]     # (1, C)
            acc = acc + xrow[:, kw:kw + W, :] * tap
    acc = acc + dwb_ref[...]

    # LayerNorm over channels (channels_last LN of the block).
    t = acc.reshape(TH * W, C)
    mean = jnp.mean(t, axis=-1, keepdims=True)
    var = jnp.mean((t - mean) ** 2, axis=-1, keepdims=True)
    xn = (t - mean) * jax.lax.rsqrt(var + EPS) * lnw_ref[...] + lnb_ref[...]

    # MLP on the MXU: bf16 operands, f32 accumulation.
    hid = jnp.dot(xn.astype(w1_ref.dtype), w1_ref[...],
                  preferred_element_type=jnp.float32) + b1_ref[...]
    # Exact GELU (matches torch.nn.GELU default, erf-based).
    hid = 0.5 * hid * (1.0 + jax.lax.erf(hid * INV_SQRT2))
    y = jnp.dot(hid.astype(w2_ref.dtype), w2_ref[...],
                preferred_element_type=jnp.float32) + b2_ref[...]
    y = y * g_ref[...]

    # Residual read from the (already resident) padded window center.
    res = xwin[3:3 + TH, 3:3 + W, :].reshape(TH * W, C)
    o_ref[0] = (y + res).reshape(TH, W, C).astype(o_ref.dtype)


def convnext_block(x_nhwc, bp):
    N, H, W, C = x_nhwc.shape
    TH = _pick_row_tile(H, W)
    kern = functools.partial(block_kernel, TH=TH, H=H, W=W, C=C)
    return pl.pallas_call(
        kern,
        out_shape=jax.ShapeDtypeStruct((N, H, W, C), x_nhwc.dtype),
        grid=(N, H // TH),
        in_specs=[
            pl.BlockSpec((1, H, W, C), lambda n, h: (n, 0, 0, 0)),
            pl.BlockSpec((49, C), lambda n, h: (0, 0)),
            pl.BlockSpec((1, C), lambda n, h: (0, 0)),
            pl.BlockSpec((1, C), lambda n, h: (0, 0)),
            pl.BlockSpec((1, C), lambda n, h: (0, 0)),
            pl.BlockSpec((C, 4 * C), lambda n, h: (0, 0)),
            pl.BlockSpec((1, 4 * C), lambda n, h: (0, 0)),
            pl.BlockSpec((4 * C, C), lambda n, h: (0, 0)),
            pl.BlockSpec((1, C), lambda n, h: (0, 0)),
            pl.BlockSpec((1, C), lambda n, h: (0, 0)),
        ],
        out_specs=pl.BlockSpec((1, TH, W, C), lambda n, h: (n, h, 0, 0)),
        scratch_shapes=[pltpu.VMEM((H + 6, W + 6, C), jnp.float32)],
        compiler_params=pltpu.CompilerParams(
            dimension_semantics=("parallel", "arbitrary"),
            vmem_limit_bytes=VMEM_LIMIT_BYTES),
    )(x_nhwc, bp["dw_w"], bp["dw_b"].reshape(1, C),
      bp["ln_w"].reshape(1, C), bp["ln_b"].reshape(1, C),
      bp["w1"].astype(MXU_DTYPE), bp["b1"].reshape(1, 4 * C),
      bp["w2"].astype(MXU_DTYPE), bp["b2"].reshape(1, C),
      bp["gamma"].reshape(1, C))


# --------------------------------------------------------------------------
# ConvNeXtLayer forward
# --------------------------------------------------------------------------
def convnext_layer_forward(x_nchw, params):
    x = jnp.transpose(x_nchw, (0, 2, 3, 1))     # NCHW -> NHWC
    if params["downsample"]:
        x = downsample(x, params["downsample_params"])
    for bp in params["blocks"]:
        x = convnext_block(x, bp)
    return jnp.transpose(x, (0, 3, 1, 2))       # back to NCHW


# --------------------------------------------------------------------------
# Deterministic parameter initialization (shapes follow the PyTorch module).
# NOTE for real torch checkpoints: Conv2d (Cout,Cin,2,2) must be permuted to
# (kh,kw,Cin,Cout) before the reshape below, dwconv (C,1,7,7) flattened to
# (49,C), and Linear (out,in) transposed to (in,out).
# --------------------------------------------------------------------------
def init_params(key, dim, depth, downsample=True, layer_scale_init_value=1e-6):
    params = {"downsample": downsample, "blocks": []}
    if downsample:
        k1, k2, key = jax.random.split(key, 3)
        c2 = 2 * dim
        conv_w = jax.random.normal(k1, (2, 2, dim, c2), jnp.float32) * 0.1
        params["downsample_params"] = {
            "ln_w": jnp.ones((dim,), jnp.float32),
            "ln_b": jnp.zeros((dim,), jnp.float32),
            "conv_w": conv_w.reshape(4 * dim, c2),
            "conv_b": jax.random.normal(k2, (c2,), jnp.float32) * 0.1,
        }
        dim = c2

    hid = 4 * dim
    for _ in range(depth):
        keys = jax.random.split(key, 7)
        key = keys[0]
        bp = {
            "dw_w": jax.random.normal(keys[1], (49, dim), jnp.float32) * 0.1,
            "dw_b": jax.random.normal(keys[2], (dim,), jnp.float32) * 0.1,
            "ln_w": jnp.ones((dim,), jnp.float32),
            "ln_b": jnp.zeros((dim,), jnp.float32),
            "w1": jax.random.normal(keys[3], (dim, hid), jnp.float32) * 0.1,
            "b1": jax.random.normal(keys[4], (hid,), jnp.float32) * 0.1,
            "w2": jax.random.normal(keys[5], (hid, dim), jnp.float32) * 0.1,
            "b2": jax.random.normal(keys[6], (dim,), jnp.float32) * 0.1,
            "gamma": jnp.full((dim,), layer_scale_init_value, jnp.float32),
        }
        params["blocks"].append(bp)
    return params


# --------------------------------------------------------------------------
# Pure-JAX reference (f32) for a numerical cross-check of the kernels.
# --------------------------------------------------------------------------
def _reference_forward(x_nchw, params):
    x = jnp.transpose(x_nchw, (0, 2, 3, 1)).astype(jnp.float32)

    def ln(t, w, b):
        m = jnp.mean(t, axis=-1, keepdims=True)
        v = jnp.mean((t - m) ** 2, axis=-1, keepdims=True)
        return (t - m) / jnp.sqrt(v + EPS) * w + b

    if params["downsample"]:
        p = params["downsample_params"]
        N, H, W, C = x.shape
        xl = ln(x, p["ln_w"], p["ln_b"])
        patches = xl.reshape(N, H // 2, 2, W // 2, 2, C).transpose(0, 1, 3, 2, 4, 5)
        patches = patches.reshape(N, H // 2, W // 2, 4 * C)
        x = patches @ p["conv_w"] + p["conv_b"]

    for bp in params["blocks"]:
        N, H, W, C = x.shape
        xp = jnp.pad(x, ((0, 0), (3, 3), (3, 3), (0, 0)))
        d = jnp.zeros_like(x)
        for kh in range(7):
            for kw in range(7):
                d = d + xp[:, kh:kh + H, kw:kw + W, :] * bp["dw_w"][kh * 7 + kw]
        d = d + bp["dw_b"]
        t = ln(d, bp["ln_w"], bp["ln_b"])
        hdim = jax.nn.gelu(t @ bp["w1"] + bp["b1"], approximate=False)
        y = hdim @ bp["w2"] + bp["b2"]
        x = x + bp["gamma"] * y

    return jnp.transpose(x, (0, 3, 1, 2))


if __name__ == "__main__":
    key = jax.random.PRNGKey(0)
    kx, kp = jax.random.split(key)
    x = jax.random.normal(kx, (2, 4, 16, 16), jnp.float32)  # NCHW, dim=4
    params = init_params(kp, dim=4, depth=2, downsample=True)

    out = jax.block_until_ready(convnext_layer_forward(x, params))
    assert out.shape == (2, 8, 8, 8), out.shape  # (N, 2*dim, H/2, W/2)
    assert bool(jnp.all(jnp.isfinite(out)))

    ref = _reference_forward(x, params)
    max_err = float(jnp.max(jnp.abs(out - ref)))
    assert bool(jnp.allclose(out, ref, rtol=5e-2, atol=5e-2)), max_err

    print("KERNEL_OK")
</pallas_src>

<mosaic_0001>
module attributes {stable_mosaic.version = 11 : i64} {
  func.func @downsample_kernel(%arg0: i32, %arg1: i32, %arg2: memref<1x16x8x8xf32, #tpu.memory_space<vmem>>, %arg3: memref<1x4xf32, #tpu.memory_space<vmem>>, %arg4: memref<1x4xf32, #tpu.memory_space<vmem>>, %arg5: memref<16x8xbf16, #tpu.memory_space<vmem>>, %arg6: memref<1x8xf32, #tpu.memory_space<vmem>>, %arg7: memref<1x8x8x8xf32, #tpu.memory_space<vmem>>) attributes {dimension_semantics = [#tpu.dimension_semantics<parallel>, #tpu.dimension_semantics<parallel>], iteration_bounds = array<i64: 2, 1>, scalar_prefetch = 0 : i64, scratch_operands = 0 : i64, tpu.core_type = #tpu.core_type<tc>, window_params = [{transform_indices = @transform_0, window_bounds = array<i64: 1, 16, 8, 8>}, {pipeline_mode = #tpu.pipeline_mode<synchronous>, transform_indices = @transform_1, window_bounds = array<i64: 1, 4>}, {pipeline_mode = #tpu.pipeline_mode<synchronous>, transform_indices = @transform_2, window_bounds = array<i64: 1, 4>}, {pipeline_mode = #tpu.pipeline_mode<synchronous>, transform_indices = @transform_3, window_bounds = array<i64: 16, 8>}, {pipeline_mode = #tpu.pipeline_mode<synchronous>, transform_indices = @transform_4, window_bounds = array<i64: 1, 8>}, {transform_indices = @transform_5, window_bounds = array<i64: 1, 8, 8, 8>}]} {
    %c0 = arith.constant 0 : index
    %c0_0 = arith.constant 0 : index
    %c0_1 = arith.constant 0 : index
    %c0_2 = arith.constant 0 : index
    %0 = vector.load %arg2[%c0, %c0_0, %c0_1, %c0_2] : memref<1x16x8x8xf32, #tpu.memory_space<vmem>>, vector<1x16x8x8xf32>
    %1 = vector.shape_cast %0 : vector<1x16x8x8xf32> to vector<16x8x8xf32>
    %c0_3 = arith.constant 0 : index
    %c0_4 = arith.constant 0 : index
    %2 = vector.load %arg3[%c0_3, %c0_4] : memref<1x4xf32, #tpu.memory_space<vmem>>, vector<1x4xf32>
    %c0_5 = arith.constant 0 : index
    %c0_6 = arith.constant 0 : index
    %3 = vector.load %arg4[%c0_5, %c0_6] : memref<1x4xf32, #tpu.memory_space<vmem>>, vector<1x4xf32>
    %4 = vector.extract_strided_slice %1 {offsets = [0, 0, 0], sizes = [16, 8, 4], strides = [1, 1, 1]} : vector<16x8x8xf32> to vector<16x8x4xf32>
    %cst = arith.constant dense<0.000000e+00> : vector<16x8xf32>
    %5 = vector.multi_reduction <add>, %4, %cst [2] : vector<16x8x4xf32> to vector<16x8xf32>
    %6 = vector.shape_cast %5 : vector<16x8xf32> to vector<16x8x1xf32>
    %cst_7 = arith.constant 4.000000e+00 : f32
    %7 = vector.broadcast %cst_7 : f32 to vector<16x8x1xf32>
    %8 = arith.divf %6, %7 : vector<16x8x1xf32>
    %9 = vector.broadcast %8 : vector<16x8x1xf32> to vector<16x8x4xf32>
    %10 = arith.subf %4, %9 : vector<16x8x4xf32>
    %11 = arith.mulf %10, %10 : vector<16x8x4xf32>
    %cst_8 = arith.constant dense<0.000000e+00> : vector<16x8xf32>
    %12 = vector.multi_reduction <add>, %11, %cst_8 [2] : vector<16x8x4xf32> to vector<16x8xf32>
    %13 = vector.shape_cast %12 : vector<16x8xf32> to vector<16x8x1xf32>
    %cst_9 = arith.constant 4.000000e+00 : f32
    %14 = vector.broadcast %cst_9 : f32 to vector<16x8x1xf32>
    %15 = arith.divf %13, %14 : vector<16x8x1xf32>
    %16 = vector.broadcast %8 : vector<16x8x1xf32> to vector<16x8x4xf32>
    %17 = arith.subf %4, %16 : vector<16x8x4xf32>
    %cst_10 = arith.constant 9.99999997E-7 : f32
    %18 = vector.broadcast %cst_10 : f32 to vector<16x8x1xf32>
    %19 = arith.addf %15, %18 : vector<16x8x1xf32>
    %20 = math.rsqrt %19 : vector<16x8x1xf32>
    %21 = vector.broadcast %20 : vector<16x8x1xf32> to vector<16x8x4xf32>
    %22 = arith.mulf %17, %21 : vector<16x8x4xf32>
    %23 = vector.shape_cast %2 : vector<1x4xf32> to vector<1x1x4xf32>
    %24 = vector.broadcast %23 : vector<1x1x4xf32> to vector<16x8x4xf32>
    %25 = arith.mulf %22, %24 : vector<16x8x4xf32>
    %26 = vector.shape_cast %3 : vector<1x4xf32> to vector<1x1x4xf32>
    %27 = vector.broadcast %26 : vector<1x1x4xf32> to vector<16x8x4xf32>
    %28 = arith.addf %25, %27 : vector<16x8x4xf32>
    %29 = vector.extract_strided_slice %1 {offsets = [0, 0, 4], sizes = [16, 8, 4], strides = [1, 1, 1]} : vector<16x8x8xf32> to vector<16x8x4xf32>
    %cst_11 = arith.constant dense<0.000000e+00> : vector<16x8xf32>
    %30 = vector.multi_reduction <add>, %29, %cst_11 [2] : vector<16x8x4xf32> to vector<16x8xf32>
    %31 = vector.shape_cast %30 : vector<16x8xf32> to vector<16x8x1xf32>
    %cst_12 = arith.constant 4.000000e+00 : f32
    %32 = vector.broadcast %cst_12 : f32 to vector<16x8x1xf32>
    %33 = arith.divf %31, %32 : vector<16x8x1xf32>
    %34 = vector.broadcast %33 : vector<16x8x1xf32> to vector<16x8x4xf32>
    %35 = arith.subf %29, %34 : vector<16x8x4xf32>
    %36 = arith.mulf %35, %35 : vector<16x8x4xf32>
    %cst_13 = arith.constant dense<0.000000e+00> : vector<16x8xf32>
    %37 = vector.multi_reduction <add>, %36, %cst_13 [2] : vector<16x8x4xf32> to vector<16x8xf32>
    %38 = vector.shape_cast %37 : vector<16x8xf32> to vector<16x8x1xf32>
    %cst_14 = arith.constant 4.000000e+00 : f32
    %39 = vector.broadcast %cst_14 : f32 to vector<16x8x1xf32>
    %40 = arith.divf %38, %39 : vector<16x8x1xf32>
    %41 = vector.broadcast %33 : vector<16x8x1xf32> to vector<16x8x4xf32>
    %42 = arith.subf %29, %41 : vector<16x8x4xf32>
    %cst_15 = arith.constant 9.99999997E-7 : f32
    %43 = vector.broadcast %cst_15 : f32 to vector<16x8x1xf32>
    %44 = arith.addf %40, %43 : vector<16x8x1xf32>
    %45 = math.rsqrt %44 : vector<16x8x1xf32>
    %46 = vector.broadcast %45 : vector<16x8x1xf32> to vector<16x8x4xf32>
    %47 = arith.mulf %42, %46 : vector<16x8x4xf32>
    %48 = vector.shape_cast %2 : vector<1x4xf32> to vector<1x1x4xf32>
    %49 = vector.broadcast %48 : vector<1x1x4xf32> to vector<16x8x4xf32>
    %50 = arith.mulf %47, %49 : vector<16x8x4xf32>
    %51 = vector.shape_cast %3 : vector<1x4xf32> to vector<1x1x4xf32>
    %52 = vector.broadcast %51 : vector<1x1x4xf32> to vector<16x8x4xf32>
    %53 = arith.addf %50, %52 : vector<16x8x4xf32>
    %54 = tpu.concatenate %28, %53 in 2 : vector<16x8x4xf32>, vector<16x8x4xf32> -> vector<16x8x8xf32>
    %55 = vector.shape_cast %54 : vector<16x8x8xf32> to vector<8x2x8x8xf32>
    %56 = vector.extract_strided_slice %55 {offsets = [0, 0, 0, 0], sizes = [8, 1, 8, 8], strides = [1, 1, 1, 1]} : vector<8x2x8x8xf32> to vector<8x1x8x8xf32>
    %57 = vector.shape_cast %56 : vector<8x1x8x8xf32> to vector<8x8x8xf32>
    %58 = vector.extract_strided_slice %55 {offsets = [0, 1, 0, 0], sizes = [8, 1, 8, 8], strides = [1, 1, 1, 1]} : vector<8x2x8x8xf32> to vector<8x1x8x8xf32>
    %59 = vector.shape_cast %58 : vector<8x1x8x8xf32> to vector<8x8x8xf32>
    %60 = tpu.concatenate %57, %59 in 2 : vector<8x8x8xf32>, vector<8x8x8xf32> -> vector<8x8x16xf32>
    %61 = vector.shape_cast %60 : vector<8x8x16xf32> to vector<64x16xf32>
    %62 = arith.truncf %61 : vector<64x16xf32> to vector<64x16xbf16>
    %c0_16 = arith.constant 0 : index
    %c0_17 = arith.constant 0 : index
    %63 = vector.load %arg5[%c0_16, %c0_17] : memref<16x8xbf16, #tpu.memory_space<vmem>>, vector<16x8xbf16>
    %cst_18 = arith.constant dense<0.000000e+00> : vector<64x8xf32>
    %64 = tpu.matmul %62, %63, %cst_18 {dimension_numbers = #tpu.dot_dimension_numbers<[1], [0], [0], [1], [0, 0, 1, 1], [], []>} : vector<64x16xbf16>, vector<16x8xbf16>, vector<64x8xf32> -> vector<64x8xf32>
    %c0_19 = arith.constant 0 : index
    %c0_20 = arith.constant 0 : index
    %65 = vector.load %arg6[%c0_19, %c0_20] : memref<1x8xf32, #tpu.memory_space<vmem>>, vector<1x8xf32>
    %66 = vector.broadcast %65 : vector<1x8xf32> to vector<64x8xf32>
    %67 = arith.addf %64, %66 : vector<64x8xf32>
    %68 = vector.shape_cast %67 : vector<64x8xf32> to vector<8x8x8xf32>
    %c0_21 = arith.constant 0 : index
    %c0_22 = arith.constant 0 : index
    %c0_23 = arith.constant 0 : index
    %c0_24 = arith.constant 0 : index
    %69 = vector.load %arg7[%c0_21, %c0_22, %c0_23, %c0_24] : memref<1x8x8x8xf32, #tpu.memory_space<vmem>>, vector<1x8x8x8xf32>
    %70 = vector.shape_cast %69 : vector<1x8x8x8xf32> to vector<8x8x8xf32>
    %71 = vector.shape_cast %68 : vector<8x8x8xf32> to vector<1x8x8x8xf32>
    tpu.vector_store %arg7[%c0_21, %c0_22, %c0_23, %c0_24], %71 {strides = array<i32>} : memref<1x8x8x8xf32, #tpu.memory_space<vmem>>, vector<1x8x8x8xf32>,
    return
  }
  func.func @transform_0(%arg0: i32, %arg1: i32) -> (i32, i32, i32, i32) {
    %c0_i32 = arith.constant 0 : i32
    %c0_i32_0 = arith.constant 0 : i32
    %c0_i32_1 = arith.constant 0 : i32
    return %arg0, %arg1, %c0_i32, %c0_i32_0 : i32, i32, i32, i32
  }
  func.func @transform_1(%arg0: i32, %arg1: i32) -> (i32, i32) {
    %c0_i32 = arith.constant 0 : i32
    %c0_i32_0 = arith.constant 0 : i32
    %c0_i32_1 = arith.constant 0 : i32
    return %c0_i32, %c0_i32_0 : i32, i32
  }
  func.func @transform_2(%arg0: i32, %arg1: i32) -> (i32, i32) {
    %c0_i32 = arith.constant 0 : i32
    %c0_i32_0 = arith.constant 0 : i32
    %c0_i32_1 = arith.constant 0 : i32
    return %c0_i32, %c0_i32_0 : i32, i32
  }
  func.func @transform_3(%arg0: i32, %arg1: i32) -> (i32, i32) {
    %c0_i32 = arith.constant 0 : i32
    %c0_i32_0 = arith.constant 0 : i32
    %c0_i32_1 = arith.constant 0 : i32
    return %c0_i32, %c0_i32_0 : i32, i32
  }
  func.func @transform_4(%arg0: i32, %arg1: i32) -> (i32, i32) {
    %c0_i32 = arith.constant 0 : i32
    %c0_i32_0 = arith.constant 0 : i32
    %c0_i32_1 = arith.constant 0 : i32
    return %c0_i32, %c0_i32_0 : i32, i32
  }
  func.func @transform_5(%arg0: i32, %arg1: i32) -> (i32, i32, i32, i32) {
    %c0_i32 = arith.constant 0 : i32
    %c0_i32_0 = arith.constant 0 : i32
    %c0_i32_1 = arith.constant 0 : i32
    return %arg0, %arg1, %c0_i32, %c0_i32_0 : i32, i32, i32, i32
  }
}

</mosaic_0001>

<llo_original>
// kernel: tpu_custom_call.1
$region0: #{tpu_custom_call.1}
  #allocation0 [shape = 'u32[]', space=smem, size = 0x4, offset = 0x4, fixed_abs, tag = 'smem constant byte address 0x4 - core index']
  #allocation1 [shape = 'u32[144,128]{1,0:T(1,128)}', space=vmem, size = 0x12000, scoped, tag = 'internal scratch']
  %s0 = inlined_call_operand.vmem [shape: f32[2,16,8,8], index: 0, kind: input, shape index: {}]
  %s1 = inlined_call_operand.vmem [shape: f32[1,4], index: 1, kind: input, shape index: {}]
  %s2 = inlined_call_operand.vmem [shape: f32[1,4], index: 2, kind: input, shape index: {}]
  %s3 = inlined_call_operand.vmem [shape: bf16[16,8], index: 3, kind: input, shape index: {}]
  %s4 = inlined_call_operand.vmem [shape: f32[1,8], index: 4, kind: input, shape index: {}]
  %s5 = inlined_call_operand.hbm [shape: f32[2,8,8,8], index: 5, kind: output, shape index: {}]
  %s6 = sld [smem:[#allocation0]]
  $region53: #{tpu_custom_call.1} parent=0
    _
  %s8 = ssub.s32 1, %s6
  %s9 = scalar_select 0, %s8, %s6
  $region1: #{tpu_custom_call.1} parent=0
    #allocation2 [shape = 'u8[65536]{0}', space=vmem, size = 0x10000, scoped, tag = 'output window, operand 0']
    #allocation3 [shape = 's32[2]{0}', space=sflag, size = 0x8, scoped, tag = 'scoped memory for tpu_custom_call.1']
    %10 = vsyncpa [#allocation3], 0
    %s11 = scalar_lea.sflag [#allocation3], 1
    %12 = vsyncpa %s11, 0
    loop: start=0, step=1, limit=4
    $region2: #{tpu_custom_call.1} parent=1 // loop_pre_header
      _
    $region3: #{tpu_custom_call.1} parent=1 // loop_header
      %s14 = sphi 0, %s18
      %p15 = scmp.ge.s32.totalorder %s14, 4
      %s21 = sphi 0, %s33
      %s22 = sphi 0, %s29
      %s23 = sphi 0, %s21
      %s24 = sphi 0, %s22
      %s25 = sphi 0, %s23
      %s26 = sphi 0, %s24
      %s38 = sphi 0, %s40
      %s41 = sphi 0, %s38
      %s42 = sphi 0, %s41
      %s58 = sphi 0, %s42
      %s62 = sphi 0, %s62
      %s64 = sphi 0, %s62
      %s65 = sphi 0, %s64
      %s79 = sphi 0, %s65
      %s83 = sphi 0, %s83
      %s85 = sphi 0, %s83
      %s86 = sphi 0, %s85
      %s100 = sphi 0, %s86
      %s104 = sphi 0, %s104
      %s106 = sphi 0, %s104
      %s107 = sphi 0, %s106
      %s121 = sphi 0, %s107
      %s125 = sphi 0, %s125
      %s127 = sphi 0, %s125
      %s128 = sphi 0, %s127
      %s142 = sphi 0, %s128
      %s150 = sphi 0, %s152
      %s153 = sphi 0, %s150
      %s154 = sphi 0, %s153
      %s170 = sphi 0, %s154
    $region4: #{tpu_custom_call.1} parent=1 // loop_header_branch
      %17 = sbr.rel (%p15) target = $region8
    $region5: #{tpu_custom_call.1} parent=1 // loop_body
      %s19 = ssub.s32 %s14, 1
      %s20 = ssub.s32 %s14, 2
      %s27 = sadd.s32 1, %s22
      %p28 = scmp.ge.s32.totalorder %s27, 1
      %s29 = scalar_select %p28, 0, %s27
      %s30 = sadd.s32 1, %s21
      %s31 = scalar_select %p28, %s30, %s21
      %p32 = scmp.ge.s32.totalorder %s31, 2
      %s33 = scalar_select %p32, 0, %s31
      %s34 = ssub.s32 %s21, %s33
      %s35 = ssub.s32 %s22, %s29
      %s36 = sor.u32 %s34, %s35
      %p37 = scmp.eq.s32.totalorder %s36, 0
      %s39 = sadd.s32 %s38, 1
      %s40 = scalar_select %p37, %s38, %s39
      %p43 = pneg %p37
      %p44 = scmp.eq.s32.totalorder %s14, 1
      %p45 = por %p43, %p44
      %p46 = scmp.ne.s32.totalorder %s38, %s41
      %p47 = scmp.eq.s32.totalorder %s14, 0
      %p48 = por %p46, %p47
      %p49 = scmp.ne.s32.totalorder %s38, %s41
      %p50 = scmp.eq.s32.totalorder %s19, 1
      %p51 = por %p49, %p50
      %p52 = scmp.ne.s32.totalorder %s41, %s42
      %p53 = scmp.eq.s32.totalorder %s19, 0
      %p54 = por %p52, %p53
      %p55 = scmp.ne.s32.totalorder %s41, %s42
      %p56 = scmp.eq.s32.totalorder %s20, 1
      %p57 = por %p55, %p56
      %p59 = scmp.ne.s32.totalorder %s42, %s58
      %p60 = scmp.eq.s32.totalorder %s20, 0
      %p61 = por %p59, %p60
      %s63 = sadd.s32 %s62, 1
      %p66 = scmp.eq.s32.totalorder %s14, 1
      %p67 = scmp.ne.s32.totalorder %s62, %s64
      %p68 = scmp.eq.s32.totalorder %s14, 0
      %p69 = por %p67, %p68
      %p70 = scmp.ne.s32.totalorder %s62, %s64
      %p71 = scmp.eq.s32.totalorder %s19, 1
      %p72 = por %p70, %p71
      %p73 = scmp.ne.s32.totalorder %s64, %s65
      %p74 = scmp.eq.s32.totalorder %s19, 0
      %p75 = por %p73, %p74
      %p76 = scmp.ne.s32.totalorder %s64, %s65
      %p77 = scmp.eq.s32.totalorder %s20, 1
      %p78 = por %p76, %p77
      %p80 = scmp.ne.s32.totalorder %s65, %s79
      %p81 = scmp.eq.s32.totalorder %s20, 0
      %p82 = por %p80, %p81
      %s84 = sadd.s32 %s83, 1
      %p87 = scmp.eq.s32.totalorder %s14, 1
      %p88 = scmp.ne.s32.totalorder %s83, %s85
      %p89 = scmp.eq.s32.totalorder %s14, 0
      %p90 = por %p88, %p89
      %p91 = scmp.ne.s32.totalorder %s83, %s85
      %p92 = scmp.eq.s32.totalorder %s19, 1
      %p93 = por %p91, %p92
      %p94 = scmp.ne.s32.totalorder %s85, %s86
      %p95 = scmp.eq.s32.totalorder %s19, 0
      %p96 = por %p94, %p95
      %p97 = scmp.ne.s32.totalorder %s85, %s86
      %p98 = scmp.eq.s32.totalorder %s20, 1
      %p99 = por %p97, %p98
      %p101 = scmp.ne.s32.totalorder %s86, %s100
      %p102 = scmp.eq.s32.totalorder %s20, 0
      %p103 = por %p101, %p102
      %s105 = sadd.s32 %s104, 1
      %p108 = scmp.eq.s32.totalorder %s14, 1
      %p109 = scmp.ne.s32.totalorder %s104, %s106
      %p110 = scmp.eq.s32.totalorder %s14, 0
      %p111 = por %p109, %p110
      %p112 = scmp.ne.s32.totalorder %s104, %s106
      %p113 = scmp.eq.s32.totalorder %s19, 1
      %p114 = por %p112, %p113
      %p115 = scmp.ne.s32.totalorder %s106, %s107
      %p116 = scmp.eq.s32.totalorder %s19, 0
      %p117 = por %p115, %p116
      %p118 = scmp.ne.s32.totalorder %s106, %s107
      %p119 = scmp.eq.s32.totalorder %s20, 1
      %p120 = por %p118, %p119
      %p122 = scmp.ne.s32.totalorder %s107, %s121
      %p123 = scmp.eq.s32.totalorder %s20, 0
      %p124 = por %p122, %p123
      %s126 = sadd.s32 %s125, 1
      %p129 = scmp.eq.s32.totalorder %s14, 1
      %p130 = scmp.ne.s32.totalorder %s125, %s127
      %p131 = scmp.eq.s32.totalorder %s14, 0
      %p132 = por %p130, %p131
      %p133 = scmp.ne.s32.totalorder %s125, %s127
      %p134 = scmp.eq.s32.totalorder %s19, 1
      %p135 = por %p133, %p134
      %p136 = scmp.ne.s32.totalorder %s127, %s128
      %p137 = scmp.eq.s32.totalorder %s19, 0
      %p138 = por %p136, %p137
      %p139 = scmp.ne.s32.totalorder %s127, %s128
      %p140 = scmp.eq.s32.totalorder %s20, 1
      %p141 = por %p139, %p140
      %p143 = scmp.ne.s32.totalorder %s128, %s142
      %p144 = scmp.eq.s32.totalorder %s20, 0
      %p145 = por %p143, %p144
      %s146 = ssub.s32 %s21, %s33
      %s147 = ssub.s32 %s22, %s29
      %s148 = sor.u32 %s146, %s147
      %p149 = scmp.eq.s32.totalorder %s148, 0
      %s151 = sadd.s32 %s150, 1
      %s152 = scalar_select %p149, %s150, %s151
      %p155 = pneg %p149
      %p156 = scmp.eq.s32.totalorder %s14, 1
      %p157 = por %p155, %p156
      %p158 = scmp.ne.s32.totalorder %s150, %s153
      %p159 = scmp.eq.s32.totalorder %s14, 0
      %p160 = por %p158, %p159
      %p161 = scmp.ne.s32.totalorder %s150, %s153
      %p162 = scmp.eq.s32.totalorder %s19, 1
      %p163 = por %p161, %p162
      %p164 = scmp.ne.s32.totalorder %s153, %s154
      %p165 = scmp.eq.s32.totalorder %s19, 0
      %p166 = por %p164, %p165
      %p167 = scmp.ne.s32.totalorder %s153, %s154
      %p168 = scmp.eq.s32.totalorder %s20, 1
      %p169 = por %p167, %p168
      %p171 = scmp.ne.s32.totalorder %s154, %s170
      %p172 = scmp.eq.s32.totalorder %s20, 0
      %p173 = por %p171, %p172
      %p174 = scmp.le.s32.totalorder 1, %s14
      %p175 = scmp.lt.s32.totalorder %s14, 3
      %p176 = pnand %p174, %p175
      %p177 = pneg %p176
      // Predicated region
      $region9: #{tpu_custom_call.1} parent=5 // pred_check
        _
      $region10: #{tpu_custom_call.1} parent=5 // pred_check_branch
        %179 = sbr.rel (%p176) target = $region12
      $region11: #{tpu_custom_call.1} parent=5 // pred_region
        %s180 = ssub.s32 %s14, 1
        // Predicated region
        $region13: #{tpu_custom_call.1} parent=11 // pred_check
          %p181 = pneg %p75
        $region14: #{tpu_custom_call.1} parent=11 // pred_check_branch
          %183 = sbr.rel (%p181) target = $region16
        $region15: #{tpu_custom_call.1} parent=11 // pred_region
          _
        $region16: #{tpu_custom_call.1} parent=11 // pred_fallthru
          _
        // Predicated region
        $region17: #{tpu_custom_call.1} parent=11 // pred_check
          %p184 = pneg %p96
        $region18: #{tpu_custom_call.1} parent=11 // pred_check_branch
          %186 = sbr.rel (%p184) target = $region20
        $region19: #{tpu_custom_call.1} parent=11 // pred_region
          _
        $region20: #{tpu_custom_call.1} parent=11 // pred_fallthru
          _
        // Predicated region
        $region21: #{tpu_custom_call.1} parent=11 // pred_check
          %p187 = pneg %p117
        $region22: #{tpu_custom_call.1} parent=11 // pred_check_branch
          %189 = sbr.rel (%p187) target = $region24
        $region23: #{tpu_custom_call.1} parent=11 // pred_region
          _
        $region24: #{tpu_custom_call.1} parent=11 // pred_fallthru
          _
        // Predicated region
        $region25: #{tpu_custom_call.1} parent=11 // pred_check
          %p190 = pneg %p138
        $region26: #{tpu_custom_call.1} parent=11 // pred_check_branch
          %192 = sbr.rel (%p190) target = $region28
        $region27: #{tpu_custom_call.1} parent=11 // pred_region
          _
        $region28: #{tpu_custom_call.1} parent=11 // pred_fallthru
          _
      $region12: #{tpu_custom_call.1} parent=5 // pred_fallthru
        _
      %p193 = scmp.lt.s32.totalorder %s14, 2
      // Predicated region
      $region29: #{tpu_custom_call.1} parent=5 // pred_check
        %p194 = pneg %p193
      $region30: #{tpu_custom_call.1} parent=5 // pred_check_branch
        %196 = sbr.rel (%p194) target = $region32
      $region31: #{tpu_custom_call.1} parent=5 // pred_region
        // Predicated region
        $region33: #{tpu_custom_call.1} parent=31 // pred_check
          %p197 = pneg %p48
        $region34: #{tpu_custom_call.1} parent=31 // pred_check_branch
          %199 = sbr.rel (%p197) target = $region36
        $region35: #{tpu_custom_call.1} parent=31 // pred_region
          %s200 = smul.u32 16, %s22
          %p201 = scmp.lt.s32.totalorder %s21, 1
          %s202 = scalar_select %p201, %s21, 1
          %p203 = scmp.lt.s32.totalorder %s200, 15
          %s204 = scalar_select %p203, %s200, 15
          %s205 = smul.addr %s202, 16
          %s206 = sadd.s32 %s204, %s205
          %s207 = smul.addr %s206, 8
          %s208 = scalar_lea.vmem %s0, %s207
          %s209 = smul.u32 16, %s22
        $region36: #{tpu_custom_call.1} parent=31 // pred_fallthru
          _
      $region32: #{tpu_custom_call.1} parent=5 // pred_fallthru
        _
      %p210 = scmp.le.s32.totalorder 1, %s14
      %p211 = scmp.lt.s32.totalorder %s14, 3
      %p212 = pnand %p210, %p211
      %p213 = pneg %p212
      // Predicated region
      $region37: #{tpu_custom_call.1} parent=5 // pred_check
        _
      $region38: #{tpu_custom_call.1} parent=5 // pred_check_branch
        %215 = sbr.rel (%p212) target = $region40
      $region39: #{tpu_custom_call.1} parent=5 // pred_region
        %s216 = ssub.s32 %s14, 1
        %s217 = smul.u32 16, %s24
        %p218 = scmp.lt.s32.totalorder %s23, 1
        %s219 = scalar_select %p218, %s23, 1
        %p220 = scmp.lt.s32.totalorder %s217, 15
        %s221 = scalar_select %p220, %s217, 15
        %s222 = smul.addr %s219, 16
        %s223 = sadd.s32 %s221, %s222
        %s224 = smul.addr %s223, 8
        %s225 = scalar_lea.vmem %s0, %s224
        %p226 = pneg %p54
        %p227 = pneg %p51
        %p228 = pneg %p75
        %p229 = pneg %p72
        %p230 = pneg %p96
        %p231 = pneg %p93
        %p232 = pneg %p117
        %p233 = pneg %p114
        %p234 = pneg %p138
        %p235 = pneg %p135
        %p236 = pneg %p166
        %p237 = pneg %p163
        %s238 = sand.u32 %s153, 1
        %s239 = scalar_lea.sflag [#allocation3], %s238
        %s240 = sand.u32 %s153, 1
        %s241 = smul.addr %s240, 64
        %s242 = scalar_lea.vmem [#allocation2], %s241
        %s243 = smul.u32 16, %s24
        %p244 = scmp.lt.s32.totalorder %s23, 1
        %s245 = scalar_select %p244, %s23, 1
        %p246 = scmp.lt.s32.totalorder %s243, 15
        %s247 = scalar_select %p246, %s243, 15
        %s248 = smul.addr %s245, 16
        %s249 = sadd.s32 %s247, %s248
        %s250 = smul.addr %s249, 8
        %s251 = scalar_lea.vmem %s0, %s250
        %s252 = smul.u32 16, %s24
        %s253 = smul.u32 8, %s24
        %v255 = vld [vmem:[%s251] sm:$0xff]
        %v256 = vld [vmem:[%s251 + $0x8] sm:$0xff]
        %v257 = vld [vmem:[%s251 + $0x10] sm:$0xff]
        %v258 = vld [vmem:[%s251 + $0x18] sm:$0xff]
        %v259 = vld [vmem:[%s251 + $0x20] sm:$0xff]
        %v260 = vld [vmem:[%s251 + $0x28] sm:$0xff]
        %v261 = vld [vmem:[%s251 + $0x30] sm:$0xff]
        %v262 = vld [vmem:[%s251 + $0x38] sm:$0xff]
        %v263 = vld [vmem:[%s251 + $0x40] sm:$0xff]
        %v264 = vld [vmem:[%s251 + $0x48] sm:$0xff]
        %v265 = vld [vmem:[%s251 + $0x50] sm:$0xff]
        %v266 = vld [vmem:[%s251 + $0x58] sm:$0xff]
        %v267 = vld [vmem:[%s251 + $0x60] sm:$0xff]
        %v268 = vld [vmem:[%s251 + $0x68] sm:$0xff]
        %v269 = vld [vmem:[%s251 + $0x70] sm:$0xff]
        %v270 = vld [vmem:[%s251 + $0x78] sm:$0xff]
        %v271 = vld [vmem:[%s1] sm:$0x1]
        %v272 = vld [vmem:[%s2] sm:$0x1]
        %vm273 = vcmask 31744
        %v274 = vsel %vm273, %v255, 0.0
        %275 = vadd.xlane.f32.xlu0 %v274
        %v276 = vpop.xlane.xlu0 %275
        %v277 = vsel %vm273, %v256, 0.0
        %278 = vadd.xlane.f32.xlu0 %v277
        %v279 = vpop.xlane.xlu0 %278
        %v280 = vsel %vm273, %v257, 0.0
        %281 = vadd.xlane.f32.xlu0 %v280
        %v282 = vpop.xlane.xlu0 %281
        %v283 = vsel %vm273, %v258, 0.0
        %284 = vadd.xlane.f32.xlu0 %v283
        %v285 = vpop.xlane.xlu0 %284
        %v286 = vsel %vm273, %v259, 0.0
        %287 = vadd.xlane.f32.xlu0 %v286
        %v288 = vpop.xlane.xlu0 %287
        %v289 = vsel %vm273, %v260, 0.0
        %290 = vadd.xlane.f32.xlu0 %v289
        %v291 = vpop.xlane.xlu0 %290
        %v292 = vsel %vm273, %v261, 0.0
        %293 = vadd.xlane.f32.xlu0 %v292
        %v294 = vpop.xlane.xlu0 %293
        %v295 = vsel %vm273, %v262, 0.0
        %296 = vadd.xlane.f32.xlu0 %v295
        %v297 = vpop.xlane.xlu0 %296
        %v298 = vsel %vm273, %v263, 0.0
        %299 = vadd.xlane.f32.xlu0 %v298
        %v300 = vpop.xlane.xlu0 %299
        %v301 = vsel %vm273, %v264, 0.0
        %302 = vadd.xlane.f32.xlu0 %v301
        %v303 = vpop.xlane.xlu0 %302
        %v304 = vsel %vm273, %v265, 0.0
        %305 = vadd.xlane.f32.xlu0 %v304
        %v306 = vpop.xlane.xlu0 %305
        %v307 = vsel %vm273, %v266, 0.0
        %308 = vadd.xlane.f32.xlu0 %v307
        %v309 = vpop.xlane.xlu0 %308
        %v310 = vsel %vm273, %v267, 0.0
        %311 = vadd.xlane.f32.xlu0 %v310
        %v312 = vpop.xlane.xlu0 %311
        %v313 = vsel %vm273, %v268, 0.0
        %314 = vadd.xlane.f32.xlu0 %v313
        %v315 = vpop.xlane.xlu0 %314
        %v316 = vsel %vm273, %v269, 0.0
        %317 = vadd.xlane.f32.xlu0 %v316
        %v318 = vpop.xlane.xlu0 %317
        %v319 = vsel %vm273, %v270, 0.0
        %320 = vadd.xlane.f32.xlu0 %v319
        %v321 = vpop.xlane.xlu0 %320
        %v322 = vrcp.pop 4.0
        %v323 = vmul.f32 %v276, %v322
        %v324 = vmul.f32 %v279, %v322
        %v325 = vmul.f32 %v282, %v322
        %v326 = vmul.f32 %v285, %v322
        %v327 = vmul.f32 %v288, %v322
        %v328 = vmul.f32 %v291, %v322
        %v329 = vmul.f32 %v294, %v322
        %v330 = vmul.f32 %v297, %v322
        %v331 = vmul.f32 %v300, %v322
        %v332 = vmul.f32 %v303, %v322
        %v333 = vmul.f32 %v306, %v322
        %v334 = vmul.f32 %v309, %v322
        %v335 = vmul.f32 %v312, %v322
        %v336 = vmul.f32 %v315, %v322
        %v337 = vmul.f32 %v318, %v322
        %v338 = vmul.f32 %v321, %v322
        %v339 = vsub.f32 %v255, %v323
        %v340 = vsub.f32 %v256, %v324
        %v341 = vsub.f32 %v257, %v325
        %v342 = vsub.f32 %v258, %v326
        %v343 = vsub.f32 %v259, %v327
        %v344 = vsub.f32 %v260, %v328
        %v345 = vsub.f32 %v261, %v329
        %v346 = vsub.f32 %v262, %v330
        %v347 = vsub.f32 %v263, %v331
        %v348 = vsub.f32 %v264, %v332
        %v349 = vsub.f32 %v265, %v333
        %v350 = vsub.f32 %v266, %v334
        %v351 = vsub.f32 %v267, %v335
        %v352 = vsub.f32 %v268, %v336
        %v353 = vsub.f32 %v269, %v337
        %v354 = vsub.f32 %v270, %v338
        %v355 = vmul.f32 %v339, %v339
        %v356 = vmul.f32 %v340, %v340
        %v357 = vmul.f32 %v341, %v341
        %v358 = vmul.f32 %v342, %v342
        %v359 = vmul.f32 %v343, %v343
        %v360 = vmul.f32 %v344, %v344
        %v361 = vmul.f32 %v345, %v345
        %v362 = vmul.f32 %v346, %v346
        %v363 = vmul.f32 %v347, %v347
        %v364 = vmul.f32 %v348, %v348
        %v365 = vmul.f32 %v349, %v349
        %v366 = vmul.f32 %v350, %v350
        %v367 = vmul.f32 %v351, %v351
        %v368 = vmul.f32 %v352, %v352
        %v369 = vmul.f32 %v353, %v353
        %v370 = vmul.f32 %v354, %v354
        %v371 = vsel %vm273, %v355, 0.0
        %372 = vadd.xlane.f32.xlu0 %v371
        %v373 = vpop.xlane.xlu0 %372
        %v374 = vsel %vm273, %v356, 0.0
        %375 = vadd.xlane.f32.xlu0 %v374
        %v376 = vpop.xlane.xlu0 %375
        %v377 = vsel %vm273, %v357, 0.0
        %378 = vadd.xlane.f32.xlu0 %v377
        %v379 = vpop.xlane.xlu0 %378
        %v380 = vsel %vm273, %v358, 0.0
        %381 = vadd.xlane.f32.xlu0 %v380
        %v382 = vpop.xlane.xlu0 %381
        %v383 = vsel %vm273, %v359, 0.0
        %384 = vadd.xlane.f32.xlu0 %v383
        %v385 = vpop.xlane.xlu0 %384
        %v386 = vsel %vm273, %v360, 0.0
        %387 = vadd.xlane.f32.xlu0 %v386
        %v388 = vpop.xlane.xlu0 %387
        %v389 = vsel %vm273, %v361, 0.0
        %390 = vadd.xlane.f32.xlu0 %v389
        %v391 = vpop.xlane.xlu0 %390
        %v392 = vsel %vm273, %v362, 0.0
        %393 = vadd.xlane.f32.xlu0 %v392
        %v394 = vpop.xlane.xlu0 %393
        %v395 = vsel %vm273, %v363, 0.0
        %396 = vadd.xlane.f32.xlu0 %v395
        %v397 = vpop.xlane.xlu0 %396
        %v398 = vsel %vm273, %v364, 0.0
        %399 = vadd.xlane.f32.xlu0 %v398
        %v400 = vpop.xlane.xlu0 %399
        %v401 = vsel %vm273, %v365, 0.0
        %402 = vadd.xlane.f32.xlu0 %v401
        %v403 = vpop.xlane.xlu0 %402
        %v404 = vsel %vm273, %v366, 0.0
        %405 = vadd.xlane.f32.xlu0 %v404
        %v406 = vpop.xlane.xlu0 %405
        %v407 = vsel %vm273, %v367, 0.0
        %408 = vadd.xlane.f32.xlu0 %v407
        %v409 = vpop.xlane.xlu0 %408
        %v410 = vsel %vm273, %v368, 0.0
        %411 = vadd.xlane.f32.xlu0 %v410
        %v412 = vpop.xlane.xlu0 %411
        %v413 = vsel %vm273, %v369, 0.0
        %414 = vadd.xlane.f32.xlu0 %v413
        %v415 = vpop.xlane.xlu0 %414
        %v416 = vsel %vm273, %v370, 0.0
        %417 = vadd.xlane.f32.xlu0 %v416
        %v418 = vpop.xlane.xlu0 %417
        %v419 = vmul.f32 %v373, %v322
        %v420 = vmul.f32 %v376, %v322
        %v421 = vmul.f32 %v379, %v322
        %v422 = vmul.f32 %v382, %v322
        %v423 = vmul.f32 %v385, %v322
        %v424 = vmul.f32 %v388, %v322
        %v425 = vmul.f32 %v391, %v322
        %v426 = vmul.f32 %v394, %v322
        %v427 = vmul.f32 %v397, %v322
        %v428 = vmul.f32 %v400, %v322
        %v429 = vmul.f32 %v403, %v322
        %v430 = vmul.f32 %v406, %v322
        %v431 = vmul.f32 %v409, %v322
        %v432 = vmul.f32 %v412, %v322
        %v433 = vmul.f32 %v415, %v322
        %v434 = vmul.f32 %v418, %v322
        %v435 = vadd.f32 %v419, 1e-06
        %v436 = vadd.f32 %v420, 1e-06
        %v437 = vadd.f32 %v421, 1e-06
        %v438 = vadd.f32 %v422, 1e-06
        %v439 = vadd.f32 %v423, 1e-06
        %v440 = vadd.f32 %v424, 1e-06
        %v441 = vadd.f32 %v425, 1e-06
        %v442 = vadd.f32 %v426, 1e-06
        %v443 = vadd.f32 %v427, 1e-06
        %v444 = vadd.f32 %v428, 1e-06
        %v445 = vadd.f32 %v429, 1e-06
        %v446 = vadd.f32 %v430, 1e-06
        %v447 = vadd.f32 %v431, 1e-06
        %v448 = vadd.f32 %v432, 1e-06
        %v449 = vadd.f32 %v433, 1e-06
        %v450 = vadd.f32 %v434, 1e-06
        %v451 = vrsqrt.pop %v435
        %v452 = vrsqrt.pop %v436
        %v453 = vrsqrt.pop %v437
        %v454 = vrsqrt.pop %v438
        %v455 = vrsqrt.pop %v439
        %v456 = vrsqrt.pop %v440
        %v457 = vrsqrt.pop %v441
        %v458 = vrsqrt.pop %v442
        %v459 = vrsqrt.pop %v443
        %v460 = vrsqrt.pop %v444
        %v461 = vrsqrt.pop %v445
        %v462 = vrsqrt.pop %v446
        %v463 = vrsqrt.pop %v447
        %v464 = vrsqrt.pop %v448
        %v465 = vrsqrt.pop %v449
        %v466 = vrsqrt.pop %v450
        %v467 = vmul.f32 %v339, %v451
        %v468 = vmul.f32 %v340, %v452
        %v469 = vmul.f32 %v341, %v453
        %v470 = vmul.f32 %v342, %v454
        %v471 = vmul.f32 %v343, %v455
        %v472 = vmul.f32 %v344, %v456
        %v473 = vmul.f32 %v345, %v457
        %v474 = vmul.f32 %v346, %v458
        %v475 = vmul.f32 %v347, %v459
        %v476 = vmul.f32 %v348, %v460
        %v477 = vmul.f32 %v349, %v461
        %v478 = vmul.f32 %v350, %v462
        %v479 = vmul.f32 %v351, %v463
        %v480 = vmul.f32 %v352, %v464
        %v481 = vmul.f32 %v353, %v465
        %v482 = vmul.f32 %v354, %v466
        %v484 = vlaneseq
        %v485 = vshrl.u32 %v484, 7
        %v486 = vsub.s32 0, %v485
        %v487 = vrot.slane %v271, %v486
        %v489 = vmul.f32 %v467, %v487
        %v490 = vmul.f32 %v468, %v487
        %v491 = vmul.f32 %v469, %v487
        %v492 = vmul.f32 %v470, %v487
        %v493 = vmul.f32 %v471, %v487
        %v494 = vmul.f32 %v472, %v487
        %v495 = vmul.f32 %v473, %v487
        %v496 = vmul.f32 %v474, %v487
        %v497 = vmul.f32 %v475, %v487
        %v498 = vmul.f32 %v476, %v487
        %v499 = vmul.f32 %v477, %v487
        %v500 = vmul.f32 %v478, %v487
        %v501 = vmul.f32 %v479, %v487
        %v502 = vmul.f32 %v480, %v487
        %v503 = vmul.f32 %v481, %v487
        %v504 = vmul.f32 %v482, %v487
        %v506 = vlaneseq
        %v507 = vshrl.u32 %v506, 7
        %v508 = vsub.s32 0, %v507
        %v509 = vrot.slane %v272, %v508
        %v511 = vadd.f32 %v489, %v509
        %v512 = vadd.f32 %v490, %v509
        %v513 = vadd.f32 %v491, %v509
        %v514 = vadd.f32 %v492, %v509
        %v515 = vadd.f32 %v493, %v509
        %v516 = vadd.f32 %v494, %v509
        %v517 = vadd.f32 %v495, %v509
        %v518 = vadd.f32 %v496, %v509
        %v519 = vadd.f32 %v497, %v509
        %v520 = vadd.f32 %v498, %v509
        %v521 = vadd.f32 %v499, %v509
        %v522 = vadd.f32 %v500, %v509
        %v523 = vadd.f32 %v501, %v509
        %v524 = vadd.f32 %v502, %v509
        %v525 = vadd.f32 %v503, %v509
        %v526 = vadd.f32 %v504, %v509
        %543 = vrot.lane.b32.xlu0 %v255, 124
        %v544 = vpop.permute.xlu0 %543
        %545 = vrot.lane.b32.xlu0 %v256, 124
        %v546 = vpop.permute.xlu0 %545
        %547 = vrot.lane.b32.xlu0 %v257, 124
        %v548 = vpop.permute.xlu0 %547
        %549 = vrot.lane.b32.xlu0 %v258, 124
        %v550 = vpop.permute.xlu0 %549
        %551 = vrot.lane.b32.xlu0 %v259, 124
        %v552 = vpop.permute.xlu0 %551
        %553 = vrot.lane.b32.xlu0 %v260, 124
        %v554 = vpop.permute.xlu0 %553
        %555 = vrot.lane.b32.xlu0 %v261, 124
        %v556 = vpop.permute.xlu0 %555
        %557 = vrot.lane.b32.xlu0 %v262, 124
        %v558 = vpop.permute.xlu0 %557
        %559 = vrot.lane.b32.xlu0 %v263, 124
        %v560 = vpop.permute.xlu0 %559
        %561 = vrot.lane.b32.xlu0 %v264, 124
        %v562 = vpop.permute.xlu0 %561
        %563 = vrot.lane.b32.xlu0 %v265, 124
        %v564 = vpop.permute.xlu0 %563
        %565 = vrot.lane.b32.xlu0 %v266, 124
        %v566 = vpop.permute.xlu0 %565
        %567 = vrot.lane.b32.xlu0 %v267, 124
        %v568 = vpop.permute.xlu0 %567
        %569 = vrot.lane.b32.xlu0 %v268, 124
        %v570 = vpop.permute.xlu0 %569
        %571 = vrot.lane.b32.xlu0 %v269, 124
        %v572 = vpop.permute.xlu0 %571
        %573 = vrot.lane.b32.xlu0 %v270, 124
        %v574 = vpop.permute.xlu0 %573
        %v591 = vsel %vm273, %v544, 0.0
        %592 = vadd.xlane.f32.xlu0 %v591
        %v593 = vpop.xlane.xlu0 %592
        %v594 = vsel %vm273, %v546, 0.0
        %595 = vadd.xlane.f32.xlu0 %v594
        %v596 = vpop.xlane.xlu0 %595
        %v597 = vsel %vm273, %v548, 0.0
        %598 = vadd.xlane.f32.xlu0 %v597
        %v599 = vpop.xlane.xlu0 %598
        %v600 = vsel %vm273, %v550, 0.0
        %601 = vadd.xlane.f32.xlu0 %v600
        %v602 = vpop.xlane.xlu0 %601
        %v603 = vsel %vm273, %v552, 0.0
        %604 = vadd.xlane.f32.xlu0 %v603
        %v605 = vpop.xlane.xlu0 %604
        %v606 = vsel %vm273, %v554, 0.0
        %607 = vadd.xlane.f32.xlu0 %v606
        %v608 = vpop.xlane.xlu0 %607
        %v609 = vsel %vm273, %v556, 0.0
        %610 = vadd.xlane.f32.xlu0 %v609
        %v611 = vpop.xlane.xlu0 %610
        %v612 = vsel %vm273, %v558, 0.0
        %613 = vadd.xlane.f32.xlu0 %v612
        %v614 = vpop.xlane.xlu0 %613
        %v615 = vsel %vm273, %v560, 0.0
        %616 = vadd.xlane.f32.xlu0 %v615
        %v617 = vpop.xlane.xlu0 %616
        %v618 = vsel %vm273, %v562, 0.0
        %619 = vadd.xlane.f32.xlu0 %v618
        %v620 = vpop.xlane.xlu0 %619
        %v621 = vsel %vm273, %v564, 0.0
        %622 = vadd.xlane.f32.xlu0 %v621
        %v623 = vpop.xlane.xlu0 %622
        %v624 = vsel %vm273, %v566, 0.0
        %625 = vadd.xlane.f32.xlu0 %v624
        %v626 = vpop.xlane.xlu0 %625
        %v627 = vsel %vm273, %v568, 0.0
        %628 = vadd.xlane.f32.xlu0 %v627
        %v629 = vpop.xlane.xlu0 %628
        %v630 = vsel %vm273, %v570, 0.0
        %631 = vadd.xlane.f32.xlu0 %v630
        %v632 = vpop.xlane.xlu0 %631
        %v633 = vsel %vm273, %v572, 0.0
        %634 = vadd.xlane.f32.xlu0 %v633
        %v635 = vpop.xlane.xlu0 %634
        %v636 = vsel %vm273, %v574, 0.0
        %637 = vadd.xlane.f32.xlu0 %v636
        %v638 = vpop.xlane.xlu0 %637
        %v639 = vmul.f32 %v593, %v322
        %v640 = vmul.f32 %v596, %v322
        %v641 = vmul.f32 %v599, %v322
        %v642 = vmul.f32 %v602, %v322
        %v643 = vmul.f32 %v605, %v322
        %v644 = vmul.f32 %v608, %v322
        %v645 = vmul.f32 %v611, %v322
        %v646 = vmul.f32 %v614, %v322
        %v647 = vmul.f32 %v617, %v322
        %v648 = vmul.f32 %v620, %v322
        %v649 = vmul.f32 %v623, %v322
        %v650 = vmul.f32 %v626, %v322
        %v651 = vmul.f32 %v629, %v322
        %v652 = vmul.f32 %v632, %v322
        %v653 = vmul.f32 %v635, %v322
        %v654 = vmul.f32 %v638, %v322
        %v655 = vsub.f32 %v255, %v639
        %v656 = vsub.f32 %v256, %v640
        %v657 = vsub.f32 %v257, %v641
        %v658 = vsub.f32 %v258, %v642
        %v659 = vsub.f32 %v259, %v643
        %v660 = vsub.f32 %v260, %v644
        %v661 = vsub.f32 %v261, %v645
        %v662 = vsub.f32 %v262, %v646
        %v663 = vsub.f32 %v263, %v647
        %v664 = vsub.f32 %v264, %v648
        %v665 = vsub.f32 %v265, %v649
        %v666 = vsub.f32 %v266, %v650
        %v667 = vsub.f32 %v267, %v651
        %v668 = vsub.f32 %v268, %v652
        %v669 = vsub.f32 %v269, %v653
        %v670 = vsub.f32 %v270, %v654
        %v671 = vmul.f32 %v655, %v655
        %v672 = vmul.f32 %v656, %v656
        %v673 = vmul.f32 %v657, %v657
        %v674 = vmul.f32 %v658, %v658
        %v675 = vmul.f32 %v659, %v659
        %v676 = vmul.f32 %v660, %v660
        %v677 = vmul.f32 %v661, %v661
        %v678 = vmul.f32 %v662, %v662
        %v679 = vmul.f32 %v663, %v663
        %v680 = vmul.f32 %v664, %v664
        %v681 = vmul.f32 %v665, %v665
        %v682 = vmul.f32 %v666, %v666
        %v683 = vmul.f32 %v667, %v667
        %v684 = vmul.f32 %v668, %v668
        %v685 = vmul.f32 %v669, %v669
        %v686 = vmul.f32 %v670, %v670
        %703 = vrot.lane.b32.xlu0 %v671, 124
        %v704 = vpop.permute.xlu0 %703
        %705 = vrot.lane.b32.xlu0 %v672, 124
        %v706 = vpop.permute.xlu0 %705
        %707 = vrot.lane.b32.xlu0 %v673, 124
        %v708 = vpop.permute.xlu0 %707
        %709 = vrot.lane.b32.xlu0 %v674, 124
        %v710 = vpop.permute.xlu0 %709
        %711 = vrot.lane.b32.xlu0 %v675, 124
        %v712 = vpop.permute.xlu0 %711
        %713 = vrot.lane.b32.xlu0 %v676, 124
        %v714 = vpop.permute.xlu0 %713
        %715 = vrot.lane.b32.xlu0 %v677, 124
        %v716 = vpop.permute.xlu0 %715
        %717 = vrot.lane.b32.xlu0 %v678, 124
        %v718 = vpop.permute.xlu0 %717
        %719 = vrot.lane.b32.xlu0 %v679, 124
        %v720 = vpop.permute.xlu0 %719
        %721 = vrot.lane.b32.xlu0 %v680, 124
        %v722 = vpop.permute.xlu0 %721
        %723 = vrot.lane.b32.xlu0 %v681, 124
        %v724 = vpop.permute.xlu0 %723
        %725 = vrot.lane.b32.xlu0 %v682, 124
        %v726 = vpop.permute.xlu0 %725
        %727 = vrot.lane.b32.xlu0 %v683, 124
        %v728 = vpop.permute.xlu0 %727
        %729 = vrot.lane.b32.xlu0 %v684, 124
        %v730 = vpop.permute.xlu0 %729
        %731 = vrot.lane.b32.xlu0 %v685, 124
        %v732 = vpop.permute.xlu0 %731
        %733 = vrot.lane.b32.xlu0 %v686, 124
        %v734 = vpop.permute.xlu0 %733
        %v751 = vsel %vm273, %v704, 0.0
        %752 = vadd.xlane.f32.xlu0 %v751
        %v753 = vpop.xlane.xlu0 %752
        %v754 = vsel %vm273, %v706, 0.0
        %755 = vadd.xlane.f32.xlu0 %v754
        %v756 = vpop.xlane.xlu0 %755
        %v757 = vsel %vm273, %v708, 0.0
        %758 = vadd.xlane.f32.xlu0 %v757
        %v759 = vpop.xlane.xlu0 %758
        %v760 = vsel %vm273, %v710, 0.0
        %761 = vadd.xlane.f32.xlu0 %v760
        %v762 = vpop.xlane.xlu0 %761
        %v763 = vsel %vm273, %v712, 0.0
        %764 = vadd.xlane.f32.xlu0 %v763
        %v765 = vpop.xlane.xlu0 %764
        %v766 = vsel %vm273, %v714, 0.0
        %767 = vadd.xlane.f32.xlu0 %v766
        %v768 = vpop.xlane.xlu0 %767
        %v769 = vsel %vm273, %v716, 0.0
        %770 = vadd.xlane.f32.xlu0 %v769
        %v771 = vpop.xlane.xlu0 %770
        %v772 = vsel %vm273, %v718, 0.0
        %773 = vadd.xlane.f32.xlu0 %v772
        %v774 = vpop.xlane.xlu0 %773
        %v775 = vsel %vm273, %v720, 0.0
        %776 = vadd.xlane.f32.xlu0 %v775
        %v777 = vpop.xlane.xlu0 %776
        %v778 = vsel %vm273, %v722, 0.0
        %779 = vadd.xlane.f32.xlu0 %v778
        %v780 = vpop.xlane.xlu0 %779
        %v781 = vsel %vm273, %v724, 0.0
        %782 = vadd.xlane.f32.xlu0 %v781
        %v783 = vpop.xlane.xlu0 %782
        %v784 = vsel %vm273, %v726, 0.0
        %785 = vadd.xlane.f32.xlu0 %v784
        %v786 = vpop.xlane.xlu0 %785
        %v787 = vsel %vm273, %v728, 0.0
        %788 = vadd.xlane.f32.xlu0 %v787
        %v789 = vpop.xlane.xlu0 %788
        %v790 = vsel %vm273, %v730, 0.0
        %791 = vadd.xlane.f32.xlu0 %v790
        %v792 = vpop.xlane.xlu0 %791
        %v793 = vsel %vm273, %v732, 0.0
        %794 = vadd.xlane.f32.xlu0 %v793
        %v795 = vpop.xlane.xlu0 %794
        %v796 = vsel %vm273, %v734, 0.0
        %797 = vadd.xlane.f32.xlu0 %v796
        %v798 = vpop.xlane.xlu0 %797
        %v799 = vmul.f32 %v753, %v322
        %v800 = vmul.f32 %v756, %v322
        %v801 = vmul.f32 %v759, %v322
        %v802 = vmul.f32 %v762, %v322
        %v803 = vmul.f32 %v765, %v322
        %v804 = vmul.f32 %v768, %v322
        %v805 = vmul.f32 %v771, %v322
        %v806 = vmul.f32 %v774, %v322
        %v807 = vmul.f32 %v777, %v322
        %v808 = vmul.f32 %v780, %v322
        %v809 = vmul.f32 %v783, %v322
        %v810 = vmul.f32 %v786, %v322
        %v811 = vmul.f32 %v789, %v322
        %v812 = vmul.f32 %v792, %v322
        %v813 = vmul.f32 %v795, %v322
        %v814 = vmul.f32 %v798, %v322
        %v815 = vadd.f32 %v799, 1e-06
        %v816 = vadd.f32 %v800, 1e-06
        %v817 = vadd.f32 %v801, 1e-06
        %v818 = vadd.f32 %v802, 1e-06
        %v819 = vadd.f32 %v803, 1e-06
        %v820 = vadd.f32 %v804, 1e-06
        %v821 = vadd.f32 %v805, 1e-06
        %v822 = vadd.f32 %v806, 1e-06
        %v823 = vadd.f32 %v807, 1e-06
        %v824 = vadd.f32 %v808, 1e-06
        %v825 = vadd.f32 %v809, 1e-06
        %v826 = vadd.f32 %v810, 1e-06
        %v827 = vadd.f32 %v811, 1e-06
        %v828 = vadd.f32 %v812, 1e-06
        %v829 = vadd.f32 %v813, 1e-06
        %v830 = vadd.f32 %v814, 1e-06
        %v831 = vrsqrt.pop %v815
        %v832 = vrsqrt.pop %v816
        %v833 = vrsqrt.pop %v817
        %v834 = vrsqrt.pop %v818
        %v835 = vrsqrt.pop %v819
        %v836 = vrsqrt.pop %v820
        %v837 = vrsqrt.pop %v821
        %v838 = vrsqrt.pop %v822
        %v839 = vrsqrt.pop %v823
        %v840 = vrsqrt.pop %v824
        %v841 = vrsqrt.pop %v825
        %v842 = vrsqrt.pop %v826
        %v843 = vrsqrt.pop %v827
        %v844 = vrsqrt.pop %v828
        %v845 = vrsqrt.pop %v829
        %v846 = vrsqrt.pop %v830
        %v847 = vmul.f32 %v655, %v831
        %v848 = vmul.f32 %v656, %v832
        %v849 = vmul.f32 %v657, %v833
        %v850 = vmul.f32 %v658, %v834
        %v851 = vmul.f32 %v659, %v835
        %v852 = vmul.f32 %v660, %v836
        %v853 = vmul.f32 %v661, %v837
        %v854 = vmul.f32 %v662, %v838
        %v855 = vmul.f32 %v663, %v839
        %v856 = vmul.f32 %v664, %v840
        %v857 = vmul.f32 %v665, %v841
        %v858 = vmul.f32 %v666, %v842
        %v859 = vmul.f32 %v667, %v843
        %v860 = vmul.f32 %v668, %v844
        %v861 = vmul.f32 %v669, %v845
        %v862 = vmul.f32 %v670, %v846
        %863 = vrot.lane.b32.xlu0 %v487, 4
        %v864 = vpop.permute.xlu0 %863
        %v866 = vmul.f32 %v847, %v864
        %v867 = vmul.f32 %v848, %v864
        %v868 = vmul.f32 %v849, %v864
        %v869 = vmul.f32 %v850, %v864
        %v870 = vmul.f32 %v851, %v864
        %v871 = vmul.f32 %v852, %v864
        %v872 = vmul.f32 %v853, %v864
        %v873 = vmul.f32 %v854, %v864
        %v874 = vmul.f32 %v855, %v864
        %v875 = vmul.f32 %v856, %v864
        %v876 = vmul.f32 %v857, %v864
        %v877 = vmul.f32 %v858, %v864
        %v878 = vmul.f32 %v859, %v864
        %v879 = vmul.f32 %v860, %v864
        %v880 = vmul.f32 %v861, %v864
        %v881 = vmul.f32 %v862, %v864
        %882 = vrot.lane.b32.xlu0 %v509, 4
        %v883 = vpop.permute.xlu0 %882
        %v885 = vadd.f32 %v866, %v883
        %v886 = vadd.f32 %v867, %v883
        %v887 = vadd.f32 %v868, %v883
        %v888 = vadd.f32 %v869, %v883
        %v889 = vadd.f32 %v870, %v883
        %v890 = vadd.f32 %v871, %v883
        %v891 = vadd.f32 %v872, %v883
        %v892 = vadd.f32 %v873, %v883
        %v893 = vadd.f32 %v874, %v883
        %v894 = vadd.f32 %v875, %v883
        %v895 = vadd.f32 %v876, %v883
        %v896 = vadd.f32 %v877, %v883
        %v897 = vadd.f32 %v878, %v883
        %v898 = vadd.f32 %v879, %v883
        %v899 = vadd.f32 %v880, %v883
        %v900 = vadd.f32 %v881, %v883
        %v901 = vsel %vm273, %v511, %v885
        %v902 = vsel %vm273, %v512, %v886
        %v903 = vsel %vm273, %v513, %v887
        %v904 = vsel %vm273, %v514, %v888
        %v905 = vsel %vm273, %v515, %v889
        %v906 = vsel %vm273, %v516, %v890
        %v907 = vsel %vm273, %v517, %v891
        %v908 = vsel %vm273, %v518, %v892
        %v909 = vsel %vm273, %v519, %v893
        %v910 = vsel %vm273, %v520, %v894
        %v911 = vsel %vm273, %v521, %v895
        %v912 = vsel %vm273, %v522, %v896
        %v913 = vsel %vm273, %v523, %v897
        %v914 = vsel %vm273, %v524, %v898
        %v915 = vsel %vm273, %v525, %v899
        %v916 = vsel %vm273, %v526, %v900
        %925 = vrot.lane.b32.xlu0 %v902, 8
        %v926 = vpop.permute.xlu0 %925
        %927 = vrot.lane.b32.xlu0 %v904, 8
        %v928 = vpop.permute.xlu0 %927
        %929 = vrot.lane.b32.xlu0 %v906, 8
        %v930 = vpop.permute.xlu0 %929
        %931 = vrot.lane.b32.xlu0 %v908, 8
        %v932 = vpop.permute.xlu0 %931
        %933 = vrot.lane.b32.xlu0 %v910, 8
        %v934 = vpop.permute.xlu0 %933
        %935 = vrot.lane.b32.xlu0 %v912, 8
        %v936 = vpop.permute.xlu0 %935
        %937 = vrot.lane.b32.xlu0 %v914, 8
        %v938 = vpop.permute.xlu0 %937
        %939 = vrot.lane.b32.xlu0 %v916, 8
        %v940 = vpop.permute.xlu0 %939
        %vm949 = vcmask 64512
        %v950 = vsel %vm949, %v901, %v926
        %v951 = vsel %vm949, %v903, %v928
        %v952 = vsel %vm949, %v905, %v930
        %v953 = vsel %vm949, %v907, %v932
        %v954 = vsel %vm949, %v909, %v934
        %v955 = vsel %vm949, %v911, %v936
        %v956 = vsel %vm949, %v913, %v938
        %v957 = vsel %vm949, %v915, %v940
        %v958 = vpack.c.bf16 %v951, %v950
        %v959 = vpack.c.bf16 %v953, %v952
        %v960 = vpack.c.bf16 %v955, %v954
        %v961 = vpack.c.bf16 %v957, %v956
        %v962 = vld [vmem:[%s3] sm:$0xf]
        %v963 = vld [vmem:[%s3 + $0x4] sm:$0xf]
        %v964 = vld [vmem:[%s4] sm:$0x1]
        %v966 = vlaneseq
        %v967 = vshrl.u32 %v966, 7
        %v968 = vsub.s32 0, %v967
        %v969 = vrot.slane %v964, %v968
        %v973 = vunpack.c.l.b16 %v962
        %v974 = vunpack.c.l.b16 %v963
        %v975 = vpack.c.b16 %v974, %v973
        %vm977 = vcmask 130048
        %v979 = vsel %vm977, %v958, 0
        %v982 = vsel %vm977, %v959, 0
        %v985 = vsel %vm977, %v960, 0
        %v988 = vsel %vm977, %v961, 0
        %990 = vmatprep.subr.bf16.mxu0 0
        %991 = vmatpush1.bf16.msra.mxu0 %v975
        %992 = vmatprep.subr.bf16.mxu0 0
        %993 = vmatpush1.bf16.msra.mxu0 0
        %994 = vmatprep.subr.bf16.mxu0 0
        %995 = vmatpush1.bf16.msra.mxu0 0
        %996 = vmatprep.subr.bf16.mxu0 0
        %997 = vmatpush1.bf16.msra.mxu0 0
        %998 = vmatprep.subr.bf16.mxu0 0
        %999 = vmatpush1.bf16.msra.mxu0 0
        %1000 = vmatprep.subr.bf16.mxu0 0
        %1001 = vmatpush1.bf16.msra.mxu0 0
        %1002 = vmatprep.subr.bf16.mxu0 0
        %1003 = vmatpush1.bf16.msra.mxu0 0
        %1004 = vmatprep.subr.bf16.mxu0 0
        %1005 = vmatpush1.bf16.msra.mxu0 0
        %1006 = vmatprep.subr.bf16.mxu0 0
        %1007 = vmatpush1.bf16.msra.mxu0 0
        %1008 = vmatprep.subr.bf16.mxu0 0
        %1009 = vmatpush1.bf16.msra.mxu0 0
        %1010 = vmatprep.subr.bf16.mxu0 0
        %1011 = vmatpush1.bf16.msra.mxu0 0
        %1012 = vmatprep.subr.bf16.mxu0 0
        %1013 = vmatpush1.bf16.msra.mxu0 0
        %1014 = vmatprep.subr.bf16.mxu0 0
        %1015 = vmatpush1.bf16.msra.mxu0 0
        %1016 = vmatprep.subr.bf16.mxu0 0
        %1017 = vmatpush1.bf16.msra.mxu0 0
        %1018 = vmatprep.subr.bf16.mxu0 0
        %1019 = vmatpush1.bf16.msra.mxu0 0
        %1020 = vmatprep.subr.bf16.mxu0 0
        %1021 = vmatpush1.bf16.msra.mxu0 0
        %1022 = vmatprep.mubr.bf16.mxu0 0
        %1023 = vmatmul.mubr.bf16.gmra.mrb[0].mxu0 %v979
        %v1024 = vpop.f32.mrb[0].mxu0
        %v1025 = vadd.f32 %v969, %v1024
        %v1026 = vpop.f32.mrb[0].mxu0
        %v1027 = vpop.f32.mrb[0].mxu0
        %v1028 = vadd.f32 %v969, %v1027
        %v1029 = vpop.f32.mrb[0].mxu0
        %1030 = vmatprep.mubr.bf16.mxu0 0
        %1031 = vmatmul.mubr.bf16.gmra.mrb[0].mxu0 %v982
        %v1032 = vpop.f32.mrb[0].mxu0
        %v1033 = vadd.f32 %v969, %v1032
        %v1034 = vpop.f32.mrb[0].mxu0
        %v1035 = vpop.f32.mrb[0].mxu0
        %v1036 = vadd.f32 %v969, %v1035
        %v1037 = vpop.f32.mrb[0].mxu0
        %1038 = vmatprep.mubr.bf16.mxu0 0
        %1039 = vmatmul.mubr.bf16.gmra.mrb[0].mxu0 %v985
        %v1040 = vpop.f32.mrb[0].mxu0
        %v1041 = vadd.f32 %v969, %v1040
        %v1042 = vpop.f32.mrb[0].mxu0
        %v1043 = vpop.f32.mrb[0].mxu0
        %v1044 = vadd.f32 %v969, %v1043
        %v1045 = vpop.f32.mrb[0].mxu0
        %1046 = vmatprep.mubr.bf16.mxu0 0
        %1047 = vmatmul.mubr.bf16.gmra.mrb[0].mxu0 %v988
        %v1048 = vpop.f32.mrb[0].mxu0
        %v1049 = vadd.f32 %v969, %v1048
        %v1050 = vpop.f32.mrb[0].mxu0
        %v1051 = vpop.f32.mrb[0].mxu0
        %v1052 = vadd.f32 %v969, %v1051
        %v1053 = vpop.f32.mrb[0].mxu0
        %1054 = vdwg.mxu0
        %1055 = vst.msk [vmem:[%s242] sm:$0xff] %vm949, %v1025
        %1056 = vst.msk [vmem:[%s242 + $0x8] sm:$0xff] %vm949, %v1028
        %1057 = vst.msk [vmem:[%s242 + $0x10] sm:$0xff] %vm949, %v1033
        %1058 = vst.msk [vmem:[%s242 + $0x18] sm:$0xff] %vm949, %v1036
        %1059 = vst.msk [vmem:[%s242 + $0x20] sm:$0xff] %vm949, %v1041
        %1060 = vst.msk [vmem:[%s242 + $0x28] sm:$0xff] %vm949, %v1044
        %1061 = vst.msk [vmem:[%s242 + $0x30] sm:$0xff] %vm949, %v1049
        %1062 = vst.msk [vmem:[%s242 + $0x38] sm:$0xff] %vm949, %v1052
        %s1063 = sand.u32 %s153, 1
        %s1064 = scalar_lea.sflag [#allocation3], %s1063
        %s1065 = sand.u32 %s153, 1
        %s1066 = smul.addr %s1065, 64
        %s1067 = scalar_lea.vmem [#allocation2], %s1066
        // Predicated region
        $region41: #{tpu_custom_call.1} parent=39 // pred_check
          %p1068 = pneg %p163
        $region42: #{tpu_custom_call.1} parent=39 // pred_check_branch
          %1070 = sbr.rel (%p1068) target = $region44
        $region43: #{tpu_custom_call.1} parent=39 // pred_region
          %s1071 = smul.u32 8, %s24
          %s1073 = ssub.s32 1024, 1024
          %1074 = vsyncadd %s1064, %s1073
          %s1075 = smul.addr %s23, 8
          %s1076 = sadd.s32 %s1071, %s1075
          %s1077 = smul.addr %s1076, 128
          %s1078 = scalar_lea.hbm %s5, %s1077
          %s1079 = sshll.u32 %s1067, 4
          %s1080 = int_to_ptr.vmem [resolvable:$true] %s1079
          %1085 = dma.vmem_to_hbm [thread:$0]  %s1080, 1024, %s1078, %s1064, 128, 128, 8
        $region44: #{tpu_custom_call.1} parent=39 // pred_fallthru
          _
      $region40: #{tpu_custom_call.1} parent=5 // pred_fallthru
        _
      %p1086 = scmp.le.s32.totalorder 2, %s14
      // Predicated region
      $region45: #{tpu_custom_call.1} parent=5 // pred_check
        %p1087 = pneg %p1086
      $region46: #{tpu_custom_call.1} parent=5 // pred_check_branch
        %1089 = sbr.rel (%p1087) target = $region48
      $region47: #{tpu_custom_call.1} parent=5 // pred_region
        %s1090 = ssub.s32 %s14, 2
        // Predicated region
        $region49: #{tpu_custom_call.1} parent=47 // pred_check
          %p1091 = pneg %p169
        $region50: #{tpu_custom_call.1} parent=47 // pred_check_branch
          %1093 = sbr.rel (%p1091) target = $region52
        $region51: #{tpu_custom_call.1} parent=47 // pred_region
          %s1094 = sand.u32 %s154, 1
          %s1095 = scalar_lea.sflag [#allocation3], %s1094
          %s1096 = sand.u32 %s154, 1
          %s1097 = smul.addr %s1096, 64
          %s1098 = scalar_lea.vmem [#allocation2], %s1097
          %1099 = dma.done %s1095, 1024
        $region52: #{tpu_custom_call.1} parent=47 // pred_fallthru
          _
      $region48: #{tpu_custom_call.1} parent=5 // pred_fallthru
        _
    $region6: #{tpu_custom_call.1} parent=1 // loop_footer
      %s18 = sadd.s32 1, %s14
    $region7: #{tpu_custom_call.1} parent=1 // loop_footer_branch
      %13 = sbr.rel target = $region3
    $region8: #{tpu_custom_call.1} parent=1 // loop_exit
      _
    %1100 = vsyncpa [#allocation3], 1
    %s1101 = scalar_lea.sflag [#allocation3], 1
    %1102 = vsyncpa %s1101, 1

</llo_original>
